<compile_context>
chip_gen: v5e
topology: v5e:2x2
jax: 0.10.0
libtpu: 0.0.40
codegen_flags: <defaults>
</compile_context>

<pallas_src>
import functools

import jax
import jax.numpy as jnp
from jax import lax
from jax.experimental import pallas as pl
from jax.experimental.pallas import tpu as pltpu


_UNROLL_CHUNKS = 32          # statically unroll the interior chunk loop up to this count
_ACC_BYTES = 64 * 1024       # fp32 accumulator budget per chunk (~16 vregs)


def _vmem_capacity_bytes():
    """Physical VMEM per TensorCore; conservative 64 MiB (v7x) fallback."""
    try:
        return int(pltpu.get_tpu_info().vmem_capacity_bytes)
    except Exception:
        return 64 * 1024 * 1024


def _choose_tiles(B, L, L_out, C, itemsize, budget):
    """Pick (batch_tile, channel_tile, est. resident VMEM bytes per grid step)."""
    # Per grid step: double-buffered input block + double-buffered output block.
    per_ct = 2 * (L + L_out) * itemsize

    def block_bytes(bt, ct):
        return bt * ct * per_ct

    if C <= 128 or block_bytes(1, C) <= budget:
        ct = C
    else:
        ct = max(128, (budget // per_ct) // 128 * 128)
        # TODO(synk): add time-axis tiling with a (K-1) halo for extremely long
        # sequences where even a single 128-lane slab exceeds VMEM (this would
        # also let B==1, C<=128 shapes keep both v7x TensorCores busy).
    n_cblk = pl.cdiv(C, ct)

    # Pack batch elements per step to amortize the ~0.35us grid-step overhead,
    # but keep >=2 independent grid steps (v7x has 2 TensorCores) and stay
    # under the per-step budget.
    bt = 1
    pack_cap = min(budget, 12 * 1024 * 1024)
    while (bt * 2 <= B and B % (bt * 2) == 0
           and block_bytes(bt * 2, ct) <= pack_cap
           and (B // (bt * 2)) * n_cblk >= 2):
        bt *= 2
    return bt, ct, block_bytes(bt, ct)


def _moving_avg_kernel(x_ref, o_ref, *, kernel_size, stride, front_pad, seq_len, chunk):
    # x_ref: (bt, L, ct) raw input block, o_ref: (bt, L_out, ct) pooled output.
    bt, _, ct = x_ref.shape
    L_out = o_ref.shape[1]
    K = kernel_size
    L = seq_len
    inv_k = 1.0 / float(K)
    f32 = jnp.float32

    # Output rows whose window lies fully inside x (no edge clamping). All of
    # these bounds are Python ints, so slicing below stays static.
    t_lo = min(-(-front_pad // stride), L_out)
    t_hi = (front_pad + L - K) // stride + 1 if front_pad + L - K >= 0 else 0
    t_hi = max(min(t_hi, L_out), t_lo)

    # TODO(synk): for large K (>=16) switch window_sum to a chunk-local
    # cumulative-sum difference (O(1) loads per output row) to cut vld-slot
    # pressure on v7x; the K-term unroll below is fine for typical K<=25.
    def window_sum(c0, rows):
        base = c0 * stride - front_pad
        acc = jnp.zeros((bt, rows, ct), f32)
        for s in range(K):                       # static unroll
            if stride == 1:
                sl = x_ref[:, pl.ds(base + s, rows), :]      # contiguous sublanes
            else:
                sl = x_ref[:, pl.ds(base + s, rows, stride), :]  # strided sublanes
            acc = acc + sl.astype(f32)
        return acc

    def emit_chunk(c0, rows):
        o_ref[:, pl.ds(c0, rows), :] = (window_sum(c0, rows) * inv_k).astype(o_ref.dtype)

    n_interior = t_hi - t_lo
    if n_interior > 0:
        # Peel a short head so every main-loop chunk starts on a sublane (8)
        # boundary -> aligned, unmasked stores on the hot path.
        head_end = min(t_hi, -(-t_lo // 8) * 8)
        if head_end > t_lo:
            emit_chunk(t_lo, head_end - t_lo)
        n_main = t_hi - head_end
        n_full = n_main // chunk
        tail = n_main - n_full * chunk
        if n_full > 0:
            if n_full <= _UNROLL_CHUNKS:
                for i in range(n_full):          # static unroll, static 8-aligned starts
                    emit_chunk(head_end + i * chunk, chunk)
            else:
                def body(i, carry):              # fallback for very long sequences
                    c0 = pl.multiple_of(head_end + i * chunk, 8)
                    emit_chunk(c0, chunk)
                    return carry
                lax.fori_loop(0, n_full, body, 0)
        if tail > 0:
            emit_chunk(head_end + n_full * chunk, tail)

    # Edge rows whose window overlaps the replicate padding: weight the clamped
    # samples by their repeat count instead of materializing any padded copy.
    def edge_row(t):
        lo = t * stride - front_pad
        n_front = max(0, -lo)                    # samples clamped to x[0]
        n_back = max(0, lo + K - L)              # samples clamped to x[L-1]
        a, b = max(lo, 0), min(lo + K, L)        # contiguous in-range part
        acc = jnp.zeros((bt, 1, ct), f32)
        if n_front > 0:
            acc = acc + float(n_front) * x_ref[:, 0:1, :].astype(f32)
        if n_back > 0:
            acc = acc + float(n_back) * x_ref[:, L - 1:L, :].astype(f32)
        if b > a:
            acc = acc + jnp.sum(x_ref[:, a:b, :].astype(f32), axis=1, keepdims=True)
        o_ref[:, t:t + 1, :] = (acc * inv_k).astype(o_ref.dtype)

    for t in range(t_lo):                        # front edge (<= ~K/2 rows)
        edge_row(t)
    for t in range(t_hi, L_out):                 # back edge (<= ~K/2 rows)
        edge_row(t)


def _moving_avg_pallas(x, kernel_size, stride, front_pad, end_pad):
    B, L, C = x.shape
    K = kernel_size
    L_pad = L + front_pad + end_pad
    L_out = (L_pad - K) // stride + 1

    itemsize = jnp.dtype(x.dtype).itemsize
    vmem_cap = _vmem_capacity_bytes()
    # ~16 MiB per-step budget on v7x (64 MiB/TC), 32 MiB on v5e/v6e (128 MiB).
    budget = min(max(vmem_cap // 4, 8 * 1024 * 1024), 32 * 1024 * 1024)
    bt, ct, block_bytes = _choose_tiles(B, L, L_out, C, itemsize, budget)

    # Time rows per inner chunk so the fp32 accumulator stays ~16 vregs.
    lanes = -(-ct // 128) * 128
    chunk = max(8, min((_ACC_BYTES // (bt * lanes * 4)) // 8 * 8, 512))

    kernel = functools.partial(
        _moving_avg_kernel, kernel_size=K, stride=stride,
        front_pad=front_pad, seq_len=L, chunk=chunk)

    # Always pass an explicit VMEM limit: the v5e default scoped limit (16 MiB)
    # is below the largest blocks we size on v5e/v6e.
    vmem_limit = int(min(vmem_cap - (8 << 20),
                         max(block_bytes + (6 << 20), 24 << 20)))

    return pl.pallas_call(
        kernel,
        out_shape=jax.ShapeDtypeStruct((B, L_out, C), x.dtype),
        grid_spec=pltpu.PrefetchScalarGridSpec(
            num_scalar_prefetch=0,
            grid=(B // bt, pl.cdiv(C, ct)),
            in_specs=[pl.BlockSpec((bt, L, ct), lambda b, c: (b, 0, c))],
            out_specs=pl.BlockSpec((bt, L_out, ct), lambda b, c: (b, 0, c)),
        ),
        compiler_params=pltpu.CompilerParams(
            dimension_semantics=("parallel", "parallel"),
            vmem_limit_bytes=vmem_limit),
        cost_estimate=pl.CostEstimate(
            flops=B * L_out * C * K,
            transcendentals=0,
            bytes_accessed=(B * L * C + B * L_out * C) * itemsize),
    )(x)


def moving_avg(x, kernel_size, stride):
    """Moving average over the time axis with replicate padding.

    Matches the PyTorch `moving_avg` module:
        front = x[:, :1].repeat(K//2 if K even else (K-1)//2)
        end   = x[:, -1:].repeat((K-1)//2)
        out   = AvgPool1d(kernel_size=K, stride=stride, padding=0)(cat)
    """
    B, L, C = x.shape
    K = int(kernel_size)
    stride = int(stride)
    front_pad = K // 2 if K % 2 == 0 else (K - 1) // 2
    end_pad = (K - 1) // 2
    L_out = (L + front_pad + end_pad - K) // stride + 1

    # Lane density: with few channels (DLinear/Autoformer C=7..21) fold batch
    # into the lane axis so vregs / output stores / DMA rows are dense. The
    # pooling acts independently per lane column, so the fold is exact.
    fold = (C < 64) and (B > 1)
    if fold:
        xk = jnp.transpose(x, (1, 0, 2)).reshape(1, L, B * C)
    else:
        xk = x

    out = _moving_avg_pallas(xk, K, stride, front_pad, end_pad)

    if fold:
        out = jnp.transpose(out.reshape(L_out, B, C), (1, 0, 2))
    return out


def _reference_moving_avg(x, kernel_size, stride):
    """Pure-JAX reference mirroring the PyTorch semantics exactly."""
    B, L, C = x.shape
    K = kernel_size
    front_pad = K // 2 if K % 2 == 0 else (K - 1) // 2
    end_pad = (K - 1) // 2
    front = jnp.repeat(x[:, 0:1, :], front_pad, axis=1)
    end = jnp.repeat(x[:, -1:, :], end_pad, axis=1)
    xp = jnp.concatenate([front, x, end], axis=1)
    L_pad = L + front_pad + end_pad
    L_out = (L_pad - K) // stride + 1
    windows = jnp.stack(
        [xp[:, s: s + (L_out - 1) * stride + 1: stride, :] for s in range(K)],
        axis=0,
    )
    return windows.mean(axis=0)


if __name__ == "__main__":
    key = jax.random.PRNGKey(0)
    tests = [
        # (B, L, C, kernel_size, stride)
        (2, 16, 32, 4, 1),   # even kernel (asymmetric replicate padding), lane-folded
        (2, 24, 7, 5, 1),    # odd kernel, DLinear-style 7 channels, lane-folded
        (2, 16, 32, 6, 2),   # stride > 1 (strided windows computed in-kernel)
        (1, 16, 8, 3, 1),    # single batch element (no fold), odd kernel
    ]
    for i, (B, L, C, K, S) in enumerate(tests):
        k = jax.random.fold_in(key, i)
        x = jax.random.normal(k, (B, L, C), dtype=jnp.float32)
        out = jax.block_until_ready(moving_avg(x, K, S))
        ref = _reference_moving_avg(x, K, S)
        assert out.shape == ref.shape, (out.shape, ref.shape)
        assert jnp.allclose(out, ref, atol=1e-5, rtol=1e-5), (B, L, C, K, S)
    print("KERNEL_OK")
</pallas_src>

<mosaic_0001>
module attributes {stable_mosaic.version = 11 : i64} {
  func.func @_moving_avg_kernel(%arg0: i32, %arg1: i32, %arg2: memref<1x16x64xf32, #tpu.memory_space<vmem>>, %arg3: memref<1x16x64xf32, #tpu.memory_space<vmem>>) attributes {dimension_semantics = [#tpu.dimension_semantics<parallel>, #tpu.dimension_semantics<parallel>], iteration_bounds = array<i64: 1, 1>, scalar_prefetch = 0 : i64, scratch_operands = 0 : i64, tpu.core_type = #tpu.core_type<tc>, window_params = [{transform_indices = @transform_0, window_bounds = array<i64: 1, 16, 64>}, {transform_indices = @transform_1, window_bounds = array<i64: 1, 16, 64>}]} {
    %cst = arith.constant 0.000000e+00 : f32
    %0 = vector.broadcast %cst : f32 to vector<1x6x64xf32>
    %c0 = arith.constant 0 : index
    %c0_0 = arith.constant 0 : index
    %c0_1 = arith.constant 0 : index
    %1 = vector.load %arg2[%c0, %c0_0, %c0_1] : memref<1x16x64xf32, #tpu.memory_space<vmem>>, vector<1x6x64xf32>
    %2 = arith.addf %0, %1 : vector<1x6x64xf32>
    %c0_2 = arith.constant 0 : index
    %c1 = arith.constant 1 : index
    %c0_3 = arith.constant 0 : index
    %3 = vector.load %arg2[%c0_2, %c1, %c0_3] : memref<1x16x64xf32, #tpu.memory_space<vmem>>, vector<1x6x64xf32>
    %4 = arith.addf %2, %3 : vector<1x6x64xf32>
    %c0_4 = arith.constant 0 : index
    %c2 = arith.constant 2 : index
    %c0_5 = arith.constant 0 : index
    %5 = vector.load %arg2[%c0_4, %c2, %c0_5] : memref<1x16x64xf32, #tpu.memory_space<vmem>>, vector<1x6x64xf32>
    %6 = arith.addf %4, %5 : vector<1x6x64xf32>
    %c0_6 = arith.constant 0 : index
    %c3 = arith.constant 3 : index
    %c0_7 = arith.constant 0 : index
    %7 = vector.load %arg2[%c0_6, %c3, %c0_7] : memref<1x16x64xf32, #tpu.memory_space<vmem>>, vector<1x6x64xf32>
    %8 = arith.addf %6, %7 : vector<1x6x64xf32>
    %cst_8 = arith.constant 2.500000e-01 : f32
    %9 = vector.broadcast %cst_8 : f32 to vector<1x6x64xf32>
    %10 = arith.mulf %8, %9 : vector<1x6x64xf32>
    %c0_9 = arith.constant 0 : index
    %c2_10 = arith.constant 2 : index
    %c0_11 = arith.constant 0 : index
    %11 = vector.load %arg3[%c0_9, %c2_10, %c0_11] : memref<1x16x64xf32, #tpu.memory_space<vmem>>, vector<1x6x64xf32>
    tpu.vector_store %arg3[%c0_9, %c2_10, %c0_11], %10 {strides = array<i32>} : memref<1x16x64xf32, #tpu.memory_space<vmem>>, vector<1x6x64xf32>,
    %cst_12 = arith.constant 0.000000e+00 : f32
    %12 = vector.broadcast %cst_12 : f32 to vector<1x7x64xf32>
    %c0_13 = arith.constant 0 : index
    %c6 = arith.constant 6 : index
    %c0_14 = arith.constant 0 : index
    %13 = vector.load %arg2[%c0_13, %c6, %c0_14] : memref<1x16x64xf32, #tpu.memory_space<vmem>>, vector<1x7x64xf32>
    %14 = arith.addf %12, %13 : vector<1x7x64xf32>
    %c0_15 = arith.constant 0 : index
    %c7 = arith.constant 7 : index
    %c0_16 = arith.constant 0 : index
    %15 = vector.load %arg2[%c0_15, %c7, %c0_16] : memref<1x16x64xf32, #tpu.memory_space<vmem>>, vector<1x7x64xf32>
    %16 = arith.addf %14, %15 : vector<1x7x64xf32>
    %c0_17 = arith.constant 0 : index
    %c8 = arith.constant 8 : index
    %c0_18 = arith.constant 0 : index
    %17 = vector.load %arg2[%c0_17, %c8, %c0_18] : memref<1x16x64xf32, #tpu.memory_space<vmem>>, vector<1x7x64xf32>
    %18 = arith.addf %16, %17 : vector<1x7x64xf32>
    %c0_19 = arith.constant 0 : index
    %c9 = arith.constant 9 : index
    %c0_20 = arith.constant 0 : index
    %19 = vector.load %arg2[%c0_19, %c9, %c0_20] : memref<1x16x64xf32, #tpu.memory_space<vmem>>, vector<1x7x64xf32>
    %20 = arith.addf %18, %19 : vector<1x7x64xf32>
    %cst_21 = arith.constant 2.500000e-01 : f32
    %21 = vector.broadcast %cst_21 : f32 to vector<1x7x64xf32>
    %22 = arith.mulf %20, %21 : vector<1x7x64xf32>
    %c0_22 = arith.constant 0 : index
    %c8_23 = arith.constant 8 : index
    %c0_24 = arith.constant 0 : index
    %23 = vector.load %arg3[%c0_22, %c8_23, %c0_24] : memref<1x16x64xf32, #tpu.memory_space<vmem>>, vector<1x7x64xf32>
    tpu.vector_store %arg3[%c0_22, %c8_23, %c0_24], %22 {strides = array<i32>} : memref<1x16x64xf32, #tpu.memory_space<vmem>>, vector<1x7x64xf32>,
    %cst_25 = arith.constant 0.000000e+00 : f32
    %24 = vector.broadcast %cst_25 : f32 to vector<1x1x64xf32>
    %c0_26 = arith.constant 0 : index
    %c0_27 = arith.constant 0 : index
    %c0_28 = arith.constant 0 : index
    %25 = vector.load %arg2[%c0_26, %c0_27, %c0_28] : memref<1x16x64xf32, #tpu.memory_space<vmem>>, vector<1x1x64xf32>
    %cst_29 = arith.constant 2.000000e+00 : f32
    %26 = vector.broadcast %cst_29 : f32 to vector<1x1x64xf32>
    %27 = arith.mulf %26, %25 : vector<1x1x64xf32>
    %28 = arith.addf %24, %27 : vector<1x1x64xf32>
    %c0_30 = arith.constant 0 : index
    %c0_31 = arith.constant 0 : index
    %c0_32 = arith.constant 0 : index
    %29 = vector.load %arg2[%c0_30, %c0_31, %c0_32] : memref<1x16x64xf32, #tpu.memory_space<vmem>>, vector<1x2x64xf32>
    %cst_33 = arith.constant dense<0.000000e+00> : vector<1x64xf32>
    %30 = vector.multi_reduction <add>, %29, %cst_33 [1] : vector<1x2x64xf32> to vector<1x64xf32>
    %31 = vector.shape_cast %30 : vector<1x64xf32> to vector<1x1x64xf32>
    %32 = arith.addf %28, %31 : vector<1x1x64xf32>
    %cst_34 = arith.constant 2.500000e-01 : f32
    %33 = vector.broadcast %cst_34 : f32 to vector<1x1x64xf32>
    %34 = arith.mulf %32, %33 : vector<1x1x64xf32>
    %c0_35 = arith.constant 0 : index
    %c0_36 = arith.constant 0 : index
    %c0_37 = arith.constant 0 : index
    %35 = vector.load %arg3[%c0_35, %c0_36, %c0_37] : memref<1x16x64xf32, #tpu.memory_space<vmem>>, vector<1x1x64xf32>
    tpu.vector_store %arg3[%c0_35, %c0_36, %c0_37], %34 {strides = array<i32>} : memref<1x16x64xf32, #tpu.memory_space<vmem>>, vector<1x1x64xf32>,
    %cst_38 = arith.constant 0.000000e+00 : f32
    %36 = vector.broadcast %cst_38 : f32 to vector<1x1x64xf32>
    %c0_39 = arith.constant 0 : index
    %c0_40 = arith.constant 0 : index
    %c0_41 = arith.constant 0 : index
    %37 = vector.load %arg2[%c0_39, %c0_40, %c0_41] : memref<1x16x64xf32, #tpu.memory_space<vmem>>, vector<1x1x64xf32>
    %cst_42 = arith.constant 1.000000e+00 : f32
    %38 = vector.broadcast %cst_42 : f32 to vector<1x1x64xf32>
    %39 = arith.mulf %38, %37 : vector<1x1x64xf32>
    %40 = arith.addf %36, %39 : vector<1x1x64xf32>
    %c0_43 = arith.constant 0 : index
    %c0_44 = arith.constant 0 : index
    %c0_45 = arith.constant 0 : index
    %41 = vector.load %arg2[%c0_43, %c0_44, %c0_45] : memref<1x16x64xf32, #tpu.memory_space<vmem>>, vector<1x3x64xf32>
    %cst_46 = arith.constant dense<0.000000e+00> : vector<1x64xf32>
    %42 = vector.multi_reduction <add>, %41, %cst_46 [1] : vector<1x3x64xf32> to vector<1x64xf32>
    %43 = vector.shape_cast %42 : vector<1x64xf32> to vector<1x1x64xf32>
    %44 = arith.addf %40, %43 : vector<1x1x64xf32>
    %cst_47 = arith.constant 2.500000e-01 : f32
    %45 = vector.broadcast %cst_47 : f32 to vector<1x1x64xf32>
    %46 = arith.mulf %44, %45 : vector<1x1x64xf32>
    %c0_48 = arith.constant 0 : index
    %c1_49 = arith.constant 1 : index
    %c0_50 = arith.constant 0 : index
    %47 = vector.load %arg3[%c0_48, %c1_49, %c0_50] : memref<1x16x64xf32, #tpu.memory_space<vmem>>, vector<1x1x64xf32>
    tpu.vector_store %arg3[%c0_48, %c1_49, %c0_50], %46 {strides = array<i32>} : memref<1x16x64xf32, #tpu.memory_space<vmem>>, vector<1x1x64xf32>,
    %cst_51 = arith.constant 0.000000e+00 : f32
    %48 = vector.broadcast %cst_51 : f32 to vector<1x1x64xf32>
    %c0_52 = arith.constant 0 : index
    %c15 = arith.constant 15 : index
    %c0_53 = arith.constant 0 : index
    %49 = vector.load %arg2[%c0_52, %c15, %c0_53] : memref<1x16x64xf32, #tpu.memory_space<vmem>>, vector<1x1x64xf32>
    %cst_54 = arith.constant 1.000000e+00 : f32
    %50 = vector.broadcast %cst_54 : f32 to vector<1x1x64xf32>
    %51 = arith.mulf %50, %49 : vector<1x1x64xf32>
    %52 = arith.addf %48, %51 : vector<1x1x64xf32>
    %c0_55 = arith.constant 0 : index
    %c13 = arith.constant 13 : index
    %c0_56 = arith.constant 0 : index
    %53 = vector.load %arg2[%c0_55, %c13, %c0_56] : memref<1x16x64xf32, #tpu.memory_space<vmem>>, vector<1x3x64xf32>
    %cst_57 = arith.constant dense<0.000000e+00> : vector<1x64xf32>
    %54 = vector.multi_reduction <add>, %53, %cst_57 [1] : vector<1x3x64xf32> to vector<1x64xf32>
    %55 = vector.shape_cast %54 : vector<1x64xf32> to vector<1x1x64xf32>
    %56 = arith.addf %52, %55 : vector<1x1x64xf32>
    %cst_58 = arith.constant 2.500000e-01 : f32
    %57 = vector.broadcast %cst_58 : f32 to vector<1x1x64xf32>
    %58 = arith.mulf %56, %57 : vector<1x1x64xf32>
    %c0_59 = arith.constant 0 : index
    %c15_60 = arith.constant 15 : index
    %c0_61 = arith.constant 0 : index
    %59 = vector.load %arg3[%c0_59, %c15_60, %c0_61] : memref<1x16x64xf32, #tpu.memory_space<vmem>>, vector<1x1x64xf32>
    tpu.vector_store %arg3[%c0_59, %c15_60, %c0_61], %58 {strides = array<i32>} : memref<1x16x64xf32, #tpu.memory_space<vmem>>, vector<1x1x64xf32>,
    return
  }
  func.func @transform_0(%arg0: i32, %arg1: i32) -> (i32, i32, i32) {
    %c0_i32 = arith.constant 0 : i32
    %c0_i32_0 = arith.constant 0 : i32
    return %arg0, %c0_i32, %arg1 : i32, i32, i32
  }
  func.func @transform_1(%arg0: i32, %arg1: i32) -> (i32, i32, i32) {
    %c0_i32 = arith.constant 0 : i32
    %c0_i32_0 = arith.constant 0 : i32
    return %arg0, %c0_i32, %arg1 : i32, i32, i32
  }
}

</mosaic_0001>

<llo_original>
// kernel: tpu_custom_call.1
$region0: #{tpu_custom_call.1}
  #allocation0 [shape = 'u32[]', space=smem, size = 0x4, offset = 0x4, fixed_abs, tag = 'smem constant byte address 0x4 - core index']
  #allocation1 [shape = 'u32[72,128]{1,0:T(1,128)}', space=vmem, size = 0x9000, scoped, tag = 'internal scratch']
  %s0 = inlined_call_operand.hbm [shape: f32[1,16,64], index: 0, kind: input, shape index: {}]
  %s1 = inlined_call_operand.hbm [shape: f32[1,16,64], index: 1, kind: output, shape index: {}]
  %s2 = sld [smem:[#allocation0]]
  $region18: #{tpu_custom_call.1} parent=0
    _
  %s4 = ssub.s32 1, %s2
  %s5 = scalar_select 0, %s4, %s2
  $region1: #{tpu_custom_call.1} parent=0
    #allocation2 [shape = 'u8[8192]{0}', space=vmem, size = 0x2000, scoped, tag = 'input window, operand 0, single buffered']
    #allocation3 [shape = 's32[1]{0}', space=sflag, size = 0x4, scoped, tag = 'scoped memory for tpu_custom_call.1']
    #allocation4 [shape = 's32[1]{0}', space=sflag, size = 0x4, scoped, tag = 'scoped memory for tpu_custom_call.1']
    #allocation5 [shape = 'u8[8192]{0}', space=vmem, size = 0x2000, scoped, tag = 'output window, operand 0, single buffered']
    %6 = vsyncpa [#allocation3], 0
    %7 = vsyncpa [#allocation4], 0
    // Predicated region
    $region2: #{tpu_custom_call.1} parent=1 // pred_check
      _
    $region3: #{tpu_custom_call.1} parent=1 // pred_check_branch
      %9 = sbr.rel (0) target = $region5
    $region4: #{tpu_custom_call.1} parent=1 // pred_region
      %11 = vsyncadd [#allocation3], 0
      %s12 = sshll.u32 %s0, 4
      %s13 = int_to_ptr.hbm [resolvable:$true] %s12
      %s14 = sshll.u32 [#allocation2], 4
      %s15 = int_to_ptr.vmem [resolvable:$true] %s14
      %20 = dma.hbm_to_vmem [thread:$0]  %s13, 256, %s15, [#allocation3], 128, 128, 8
    $region5: #{tpu_custom_call.1} parent=1 // pred_fallthru
      _
    // Predicated region
    $region6: #{tpu_custom_call.1} parent=1 // pred_check
      _
    $region7: #{tpu_custom_call.1} parent=1 // pred_check_branch
      %22 = sbr.rel (0) target = $region9
    $region8: #{tpu_custom_call.1} parent=1 // pred_region
      %24 = dma.done [#allocation3], 256
    $region9: #{tpu_custom_call.1} parent=1 // pred_fallthru
      _
    %v25 = vld [vmem:[#allocation2] sm:$0x3f]
    %v26 = vadd.f32 %v25, 0.0
    %v27 = vld [vmem:[#allocation2 + $0x1] sm:$0x3f]
    %v28 = vadd.f32 %v26, %v27
    %v29 = vld [vmem:[#allocation2 + $0x2] sm:$0x3f]
    %v30 = vadd.f32 %v28, %v29
    %v31 = vld [vmem:[#allocation2 + $0x3] sm:$0x3f]
    %v32 = vadd.f32 %v30, %v31
    %v33 = vmul.f32 %v32, 0.25
    %vm34 = vcmask 521216
    %35 = vst.msk [vmem:[#allocation5 + $0x2] sm:$0x3f] %vm34, %v33
    %v36 = vld [vmem:[#allocation2 + $0x6] sm:$0x7f]
    %v37 = vadd.f32 %v36, 0.0
    %v38 = vld [vmem:[#allocation2 + $0x7] sm:$0x7f]
    %v39 = vadd.f32 %v37, %v38
    %v40 = vld [vmem:[#allocation2 + $0x8] sm:$0x7f]
    %v41 = vadd.f32 %v39, %v40
    %v42 = vld [vmem:[#allocation2 + $0x9] sm:$0x7f]
    %v43 = vadd.f32 %v41, %v42
    %v44 = vmul.f32 %v43, 0.25
    %vm45 = vcmask 522240
    %46 = vst.msk [vmem:[#allocation5 + $0x8] sm:$0x7f] %vm45, %v44
    %v47 = vld [vmem:[#allocation2] sm:$0x1]
    %v48 = vmul.f32 %v47, 2.0
    %v49 = vadd.f32 %v48, 0.0
    %v50 = vld [vmem:[#allocation2] sm:$0x3]
    %vm51 = vcmask 517120
    %v52 = vsel %vm51, %v50, 0.0
    %v53 = vrot.slane %v52, 4
    %v54 = vadd.f32 %v52, %v53
    %v55 = vrot.slane %v54, 2
    %v56 = vadd.f32 %v54, %v55
    %v57 = vrot.slane %v56, 1
    %v58 = vadd.f32 %v56, %v57
    %v59 = vadd.f32 %v49, %v58
    %v60 = vmul.f32 %v59, 0.25
    %vm61 = vcmask 516096
    %62 = vst.msk [vmem:[#allocation5] sm:$0x1] %vm61, %v60
    %v63 = vld [vmem:[#allocation2] sm:$0x1]
    %v64 = vadd.f32 %v63, 0.0
    %v65 = vld [vmem:[#allocation2] sm:$0x7]
    %vm66 = vcmask 518144
    %v67 = vsel %vm66, %v65, 0.0
    %v68 = vrot.slane %v67, 4
    %v69 = vadd.f32 %v67, %v68
    %v70 = vrot.slane %v69, 2
    %v71 = vadd.f32 %v69, %v70
    %v72 = vrot.slane %v71, 1
    %v73 = vadd.f32 %v71, %v72
    %v74 = vadd.f32 %v64, %v73
    %v75 = vmul.f32 %v74, 0.25
    %76 = vst.msk [vmem:[#allocation5 + $0x1] sm:$0x1] %vm61, %v75
    %v77 = vld [vmem:[#allocation2 + $0xf] sm:$0x1]
    %v78 = vadd.f32 %v77, 0.0
    %v79 = vld [vmem:[#allocation2 + $0xd] sm:$0x7]
    %v80 = vsel %vm66, %v79, 0.0
    %v81 = vrot.slane %v80, 4
    %v82 = vadd.f32 %v80, %v81
    %v83 = vrot.slane %v82, 2
    %v84 = vadd.f32 %v82, %v83
    %v85 = vrot.slane %v84, 1
    %v86 = vadd.f32 %v84, %v85
    %v87 = vadd.f32 %v78, %v86
    %v88 = vmul.f32 %v87, 0.25
    %89 = vst.msk [vmem:[#allocation5 + $0xf] sm:$0x1] %vm61, %v88
    // Predicated region
    $region10: #{tpu_custom_call.1} parent=1 // pred_check
      _
    $region11: #{tpu_custom_call.1} parent=1 // pred_check_branch
      %91 = sbr.rel (0) target = $region13
    $region12: #{tpu_custom_call.1} parent=1 // pred_region
      %93 = vsyncadd [#allocation4], 0
      %s94 = sshll.u32 [#allocation5], 4
      %s95 = int_to_ptr.vmem [resolvable:$true] %s94
      %s96 = sshll.u32 %s1, 4
      %s97 = int_to_ptr.hbm [resolvable:$true] %s96
      %102 = dma.vmem_to_hbm [thread:$0]  %s95, 256, %s97, [#allocation4], 128, 128, 8
    $region13: #{tpu_custom_call.1} parent=1 // pred_fallthru
      _
    // Predicated region
    $region14: #{tpu_custom_call.1} parent=1 // pred_check
      _
    $region15: #{tpu_custom_call.1} parent=1 // pred_check_branch
      %104 = sbr.rel (0) target = $region17
    $region16: #{tpu_custom_call.1} parent=1 // pred_region
      %106 = dma.done [#allocation4], 256
    $region17: #{tpu_custom_call.1} parent=1 // pred_fallthru
      _
    %107 = vsyncpa [#allocation3], 1
    %108 = vsyncpa [#allocation4], 1

</llo_original>
